<compile_context>
chip_gen: v7x
topology: tpu7x:2x2x1
jax: 0.10.0
libtpu: 0.0.40
codegen_flags: <defaults>
</compile_context>

<pallas_src>
import jax
import jax.numpy as jnp
from jax.experimental import pallas as pl
from jax.experimental.pallas import tpu as pltpu


OUT_LANES = 128  # lane-dense padded output width for the bbox head (true output dim = 4)


def _round_up(x, m):
    return ((x + m - 1) // m) * m


def _vmem_limit_bytes(working_set_bytes):
    # Leave headroom, never ask for more than the smallest physical VMEM (v7x: 64 MiB/TC).
    return int(min(max(working_set_bytes + (8 << 20), 32 << 20), 64 << 20))


# ----------------------------------------------------------------------------
# Kernel 1: 1x1 conv == per-pixel linear  (MDETR.input_proj), channels-first
# ----------------------------------------------------------------------------
def _conv1x1_kernel(x_ref, w_ref, b_ref, o_ref):
    # x_ref: (1, Cin, tp)   channels-first pixel tile (no wrapper transpose needed)
    # w_ref: (hidden, Cin)  PyTorch conv weight layout, 1x1 kernel dims squeezed
    # b_ref: (hidden, 1)    f32
    # o_ref: (1, hidden, tp)
    x = x_ref[0].astype(w_ref.dtype)                      # (Cin, tp), cast to compute dtype
    acc = jnp.dot(w_ref[...], x, preferred_element_type=jnp.float32)  # (hidden, tp) f32 acc
    o_ref[0] = (acc + b_ref[...]).astype(o_ref.dtype)     # f32 epilogue (bias broadcast)


def input_proj_1x1(x_nchw, w_hid_cin, b_hid, *, tp_max=512):
    """1x1 Conv2d: x (B, Cin, H, W) -> (B, hidden, H, W) with no layout transposes."""
    B, Cin, H, W = x_nchw.shape
    hidden = w_hid_cin.shape[0]
    P = H * W
    x_flat = x_nchw.reshape(B, Cin, P)  # free reshape (merge contiguous trailing dims)

    tp = max(128, min(tp_max, _round_up(P, 128)))         # lane-dim tile, 128-aligned
    n_pt = pl.cdiv(P, tp)                                 # partial edge tile handled by Pallas

    itx = x_flat.dtype.itemsize
    itw = w_hid_cin.dtype.itemsize
    working = (2 * (Cin * tp * itx + hidden * tp * itx)   # double-buffered x/out tiles
               + 2 * hidden * Cin * itw                   # resident weight (conservative x2)
               + hidden * 4)
    cost = pl.CostEstimate(
        flops=2 * B * P * Cin * hidden,
        transcendentals=0,
        bytes_accessed=(x_flat.size * itx + w_hid_cin.size * itw
                        + hidden * 4 + B * hidden * P * itx),
    )

    out_flat = pl.pallas_call(
        _conv1x1_kernel,
        out_shape=jax.ShapeDtypeStruct((B, hidden, P), x_flat.dtype),
        grid=(B, n_pt),
        in_specs=[
            pl.BlockSpec((1, Cin, tp), lambda b, p: (b, 0, p)),
            pl.BlockSpec((hidden, Cin), lambda b, p: (0, 0)),
            pl.BlockSpec((hidden, 1), lambda b, p: (0, 0)),
        ],
        out_specs=pl.BlockSpec((1, hidden, tp), lambda b, p: (b, 0, p)),
        compiler_params=pltpu.CompilerParams(
            dimension_semantics=("parallel", "parallel"),
            vmem_limit_bytes=_vmem_limit_bytes(working),
        ),
        cost_estimate=cost,
    )(x_flat, w_hid_cin, b_hid.reshape(hidden, 1).astype(jnp.float32))

    return out_flat.reshape(B, hidden, H, W)  # free reshape back to NCHW


# ----------------------------------------------------------------------------
# Kernel 2: bbox_embed = MLP(hidden, hidden, 4, 3) followed by sigmoid
# ----------------------------------------------------------------------------
def _bbox_mlp_kernel(x_ref, w1_ref, b1_ref, w2_ref, b2_ref, w3_ref, b3_ref, o_ref):
    cdt = w1_ref.dtype
    x = x_ref[...].astype(cdt)
    h1 = jnp.dot(x, w1_ref[...], preferred_element_type=jnp.float32) + b1_ref[...]
    h1 = jnp.maximum(h1, 0.0)                                             # ReLU (layer 0)
    h2 = jnp.dot(h1.astype(cdt), w2_ref[...], preferred_element_type=jnp.float32) + b2_ref[...]
    h2 = jnp.maximum(h2, 0.0)                                             # ReLU (layer 1)
    logits = jnp.dot(h2.astype(cdt), w3_ref[...], preferred_element_type=jnp.float32) + b3_ref[...]
    # sigmoid: exp on EUP + approx reciprocal on EUP; clamp keeps the exact [0, 1] range.
    sig = pl.reciprocal(1.0 + jnp.exp(-logits), approx=True)
    o_ref[...] = jnp.minimum(sig, 1.0).astype(o_ref.dtype)


def bbox_embed_sigmoid(hs, w1, b1, w2, b2, w3p, b3p, *, tm_max=256):
    """hs: (L, B, Q, hidden) -> pred boxes (L, B, Q, 4) after sigmoid."""
    L, B, Q, hidden = hs.shape
    rows = L * B * Q
    x_flat = hs.reshape(rows, hidden)  # free reshape

    tm = max(8, min(tm_max, _round_up(rows, 8)))
    n_rt = pl.cdiv(rows, tm)

    itx = x_flat.dtype.itemsize
    itw = w1.dtype.itemsize
    working = (2 * (tm * hidden * itx + tm * OUT_LANES * itx)
               + 2 * (2 * hidden * hidden + hidden * OUT_LANES) * itw
               + (2 * hidden + OUT_LANES) * 4)
    cost = pl.CostEstimate(
        flops=2 * rows * (2 * hidden * hidden + hidden * OUT_LANES),
        transcendentals=rows * OUT_LANES,
        bytes_accessed=(x_flat.size * itx
                        + (2 * hidden * hidden + hidden * OUT_LANES) * itw
                        + (2 * hidden + OUT_LANES) * 4
                        + rows * OUT_LANES * itx),
    )

    out_flat = pl.pallas_call(
        _bbox_mlp_kernel,
        out_shape=jax.ShapeDtypeStruct((rows, OUT_LANES), hs.dtype),
        grid=(n_rt,),
        in_specs=[
            pl.BlockSpec((tm, hidden), lambda i: (i, 0)),
            pl.BlockSpec((hidden, hidden), lambda i: (0, 0)),   # resident weights
            pl.BlockSpec((1, hidden), lambda i: (0, 0)),
            pl.BlockSpec((hidden, hidden), lambda i: (0, 0)),
            pl.BlockSpec((1, hidden), lambda i: (0, 0)),
            pl.BlockSpec((hidden, OUT_LANES), lambda i: (0, 0)),
            pl.BlockSpec((1, OUT_LANES), lambda i: (0, 0)),
        ],
        out_specs=pl.BlockSpec((tm, OUT_LANES), lambda i: (i, 0)),
        compiler_params=pltpu.CompilerParams(
            dimension_semantics=("parallel",),
            vmem_limit_bytes=_vmem_limit_bytes(working),
        ),
        cost_estimate=cost,
    )(x_flat, w1, b1, w2, b2, w3p, b3p)

    # Lane-dense (rows, 128) kernel output; keep only the 4 real box coordinates.
    return out_flat[:, :4].reshape(L, B, Q, 4)


# ----------------------------------------------------------------------------
# MDETR wrapper (parameters initialized deterministically in-script)
# ----------------------------------------------------------------------------
class MDETRPallas:
    def __init__(self, key, backbone_num_channels, hidden_dim, num_queries,
                 param_dtype=jnp.bfloat16):
        self.num_queries = num_queries
        self.hidden_dim = hidden_dim
        ks = jax.random.split(key, 8)
        s = 0.02
        # input_proj: Conv2d(backbone.num_channels, hidden_dim, kernel_size=1)
        # torch weight (hidden, Cin, 1, 1) stored with the 1x1 dims squeezed: (hidden, Cin).
        self.proj_w = (s * jax.random.normal(ks[0], (hidden_dim, backbone_num_channels))
                       ).astype(param_dtype)
        self.proj_b = s * jax.random.normal(ks[1], (hidden_dim,), jnp.float32)
        # bbox_embed: MLP(hidden, hidden, 4, 3) -- Linear weights stored as (in, out).
        self.w1 = (s * jax.random.normal(ks[2], (hidden_dim, hidden_dim))).astype(param_dtype)
        self.b1 = (s * jax.random.normal(ks[3], (hidden_dim,), jnp.float32)).reshape(1, hidden_dim)
        self.w2 = (s * jax.random.normal(ks[4], (hidden_dim, hidden_dim))).astype(param_dtype)
        self.b2 = (s * jax.random.normal(ks[5], (hidden_dim,), jnp.float32)).reshape(1, hidden_dim)
        w3 = s * jax.random.normal(ks[6], (hidden_dim, 4))
        b3 = s * jax.random.normal(ks[7], (4,), jnp.float32)
        # Zero-pad the final layer to 128 output lanes once at init (lane-dense stores);
        # padded columns produce sigmoid(0)=0.5 and are sliced away in the wrapper.
        self.w3p = jnp.zeros((hidden_dim, OUT_LANES), param_dtype).at[:, :4].set(
            w3.astype(param_dtype))
        self.b3p = jnp.zeros((1, OUT_LANES), jnp.float32).at[:, :4].set(b3)

    def encode(self, vis_src):
        # TODO(synk): backbone and transformer encoder are external modules with no
        # provided definition; only the MDETR-owned input_proj (1x1 conv) hot path
        # is implemented here.
        proj = input_proj_1x1(vis_src, self.proj_w, self.proj_b)
        return {"projected_src": proj}

    def decode(self, hs):
        # TODO(synk): transformer decoder is external; `hs` is supplied directly.
        outputs_coord = bbox_embed_sigmoid(
            hs, self.w1, self.b1, self.w2, self.b2, self.w3p, self.b3p
        )
        return {"pred_boxes_q": outputs_coord, "q_query": hs}


if __name__ == "__main__":
    key = jax.random.PRNGKey(0)
    k_model, k_img, k_hs = jax.random.split(key, 3)

    # Small, forward-consistent shapes.
    B, Cin, H, W = 2, 4, 16, 16          # backbone feature map (NCHW)
    hidden_dim = 32                       # transformer.d_model
    num_queries = 8
    L_dec = 2                             # decoder layers (leading dim of hs)

    model = MDETRPallas(k_model, backbone_num_channels=Cin,
                        hidden_dim=hidden_dim, num_queries=num_queries)

    # encode_and_save=True branch: input_proj on backbone features.
    vis_src = jax.random.normal(k_img, (B, Cin, H, W), jnp.float32)
    memory_cache = model.encode(vis_src)

    # encode_and_save=False branch: bbox MLP + sigmoid on decoder states.
    hs = jax.random.normal(k_hs, (L_dec, B, num_queries, hidden_dim), jnp.float32)
    out = model.decode(hs)

    jax.block_until_ready(memory_cache["projected_src"])
    jax.block_until_ready(out["pred_boxes_q"])

    assert memory_cache["projected_src"].shape == (B, hidden_dim, H, W)
    assert out["pred_boxes_q"].shape == (L_dec, B, num_queries, 4)
    assert bool(jnp.all((out["pred_boxes_q"] >= 0) & (out["pred_boxes_q"] <= 1)))

    print("KERNEL_OK")
</pallas_src>

<mosaic_0001>
module attributes {stable_mosaic.version = 11 : i64} {
  func.func @_conv1x1_kernel(%arg0: i32, %arg1: i32, %arg2: memref<1x4x256xf32, #tpu.memory_space<vmem>>, %arg3: memref<32x4xbf16, #tpu.memory_space<vmem>>, %arg4: memref<32x1xf32, #tpu.memory_space<vmem>>, %arg5: memref<1x32x256xf32, #tpu.memory_space<vmem>>) attributes {dimension_semantics = [#tpu.dimension_semantics<parallel>, #tpu.dimension_semantics<parallel>], iteration_bounds = array<i64: 2, 1>, scalar_prefetch = 0 : i64, scratch_operands = 0 : i64, tpu.core_type = #tpu.core_type<tc>, window_params = [{transform_indices = @transform_0, window_bounds = array<i64: 1, 4, 256>}, {pipeline_mode = #tpu.pipeline_mode<synchronous>, transform_indices = @transform_1, window_bounds = array<i64: 32, 4>}, {pipeline_mode = #tpu.pipeline_mode<synchronous>, transform_indices = @transform_2, window_bounds = array<i64: 32, 1>}, {transform_indices = @transform_3, window_bounds = array<i64: 1, 32, 256>}]} {
    %c0 = arith.constant 0 : index
    %c0_0 = arith.constant 0 : index
    %c0_1 = arith.constant 0 : index
    %0 = vector.load %arg2[%c0, %c0_0, %c0_1] : memref<1x4x256xf32, #tpu.memory_space<vmem>>, vector<1x4x256xf32>
    %1 = vector.shape_cast %0 : vector<1x4x256xf32> to vector<4x256xf32>
    %2 = arith.truncf %1 : vector<4x256xf32> to vector<4x256xbf16>
    %c0_2 = arith.constant 0 : index
    %c0_3 = arith.constant 0 : index
    %3 = vector.load %arg3[%c0_2, %c0_3] : memref<32x4xbf16, #tpu.memory_space<vmem>>, vector<32x4xbf16>
    %cst = arith.constant dense<0.000000e+00> : vector<32x256xf32>
    %4 = tpu.matmul %3, %2, %cst {dimension_numbers = #tpu.dot_dimension_numbers<[1], [0], [0], [1], [0, 0, 1, 1], [], []>} : vector<32x4xbf16>, vector<4x256xbf16>, vector<32x256xf32> -> vector<32x256xf32>
    %c0_4 = arith.constant 0 : index
    %c0_5 = arith.constant 0 : index
    %5 = vector.load %arg4[%c0_4, %c0_5] : memref<32x1xf32, #tpu.memory_space<vmem>>, vector<32x1xf32>
    %6 = vector.broadcast %5 : vector<32x1xf32> to vector<32x256xf32>
    %7 = arith.addf %4, %6 : vector<32x256xf32>
    %c0_6 = arith.constant 0 : index
    %c0_7 = arith.constant 0 : index
    %c0_8 = arith.constant 0 : index
    %8 = vector.load %arg5[%c0_6, %c0_7, %c0_8] : memref<1x32x256xf32, #tpu.memory_space<vmem>>, vector<1x32x256xf32>
    %9 = vector.shape_cast %8 : vector<1x32x256xf32> to vector<32x256xf32>
    %10 = vector.shape_cast %7 : vector<32x256xf32> to vector<1x32x256xf32>
    tpu.vector_store %arg5[%c0_6, %c0_7, %c0_8], %10 {strides = array<i32>} : memref<1x32x256xf32, #tpu.memory_space<vmem>>, vector<1x32x256xf32>,
    return
  }
  func.func @transform_0(%arg0: i32, %arg1: i32) -> (i32, i32, i32) {
    %c0_i32 = arith.constant 0 : i32
    %c0_i32_0 = arith.constant 0 : i32
    return %arg0, %c0_i32, %arg1 : i32, i32, i32
  }
  func.func @transform_1(%arg0: i32, %arg1: i32) -> (i32, i32) {
    %c0_i32 = arith.constant 0 : i32
    %c0_i32_0 = arith.constant 0 : i32
    %c0_i32_1 = arith.constant 0 : i32
    return %c0_i32, %c0_i32_0 : i32, i32
  }
  func.func @transform_2(%arg0: i32, %arg1: i32) -> (i32, i32) {
    %c0_i32 = arith.constant 0 : i32
    %c0_i32_0 = arith.constant 0 : i32
    %c0_i32_1 = arith.constant 0 : i32
    return %c0_i32, %c0_i32_0 : i32, i32
  }
  func.func @transform_3(%arg0: i32, %arg1: i32) -> (i32, i32, i32) {
    %c0_i32 = arith.constant 0 : i32
    %c0_i32_0 = arith.constant 0 : i32
    return %arg0, %c0_i32, %arg1 : i32, i32, i32
  }
}

</mosaic_0001>

<llo_original>
// kernel: tpu_custom_call.1
$region0: #{tpu_custom_call.1}
  #allocation0 [shape = 'u32[]', space=smem, size = 0x4, offset = 0x4, fixed_abs, tag = 'smem constant byte address 0x4 - core index']
  #allocation1 [shape = 'u32[144,128]{1,0:T(1,128)}', space=vmem, size = 0x12000, scoped, tag = 'internal scratch']
  %s0 = inlined_call_operand.vmem [shape: f32[2,4,256], index: 0, kind: input, shape index: {}]
  %s1 = inlined_call_operand.vmem [shape: bf16[32,4], index: 1, kind: input, shape index: {}]
  %s2 = inlined_call_operand.vmem [shape: f32[32,1], index: 2, kind: input, shape index: {}]
  %s3 = inlined_call_operand.hbm [shape: f32[2,32,256], index: 3, kind: output, shape index: {}]
  %s4 = sld [smem:[#allocation0]]
  $region45: #{tpu_custom_call.1} parent=0
    _
  %s6 = ssub.s32 1, %s4
  %s7 = scalar_select 0, %s6, %s4
  $region1: #{tpu_custom_call.1} parent=0
    #allocation2 [shape = 'u8[65536]{0}', space=vmem, size = 0x10000, scoped, tag = 'output window, operand 0']
    #allocation3 [shape = 's32[2]{0}', space=sflag, size = 0x8, scoped, tag = 'scoped memory for tpu_custom_call.1']
    %8 = vsyncpa [#allocation3], 0
    %s9 = scalar_lea.sflag [#allocation3], 1
    %10 = vsyncpa %s9, 0
    loop: start=0, step=1, limit=4
    $region2: #{tpu_custom_call.1} parent=1 // loop_pre_header
      _
    $region3: #{tpu_custom_call.1} parent=1 // loop_header
      %s12 = sphi 0, %s16
      %p13 = scmp.ge.s32.totalorder %s12, 4
      %s19 = sphi 0, %s31
      %s20 = sphi 0, %s27
      %s21 = sphi 0, %s19
      %s22 = sphi 0, %s20
      %s23 = sphi 0, %s21
      %s24 = sphi 0, %s22
      %s36 = sphi 0, %s38
      %s39 = sphi 0, %s36
      %s40 = sphi 0, %s39
      %s56 = sphi 0, %s40
      %s60 = sphi 0, %s60
      %s62 = sphi 0, %s60
      %s63 = sphi 0, %s62
      %s77 = sphi 0, %s63
      %s81 = sphi 0, %s81
      %s83 = sphi 0, %s81
      %s84 = sphi 0, %s83
      %s98 = sphi 0, %s84
      %s106 = sphi 0, %s108
      %s109 = sphi 0, %s106
      %s110 = sphi 0, %s109
      %s126 = sphi 0, %s110
    $region4: #{tpu_custom_call.1} parent=1 // loop_header_branch
      %15 = sbr.rel (%p13) target = $region8
    $region5: #{tpu_custom_call.1} parent=1 // loop_body
      %s17 = ssub.s32 %s12, 1
      %s18 = ssub.s32 %s12, 2
      %s25 = sadd.s32 1, %s20
      %p26 = scmp.ge.s32.totalorder %s25, 1
      %s27 = scalar_select %p26, 0, %s25
      %s28 = sadd.s32 1, %s19
      %s29 = scalar_select %p26, %s28, %s19
      %p30 = scmp.ge.s32.totalorder %s29, 2
      %s31 = scalar_select %p30, 0, %s29
      %s32 = ssub.s32 %s19, %s31
      %s33 = ssub.s32 %s20, %s27
      %s34 = sor.u32 %s32, %s33
      %p35 = scmp.eq.s32.totalorder %s34, 0
      %s37 = sadd.s32 %s36, 1
      %s38 = scalar_select %p35, %s36, %s37
      %p41 = pneg %p35
      %p42 = scmp.eq.s32.totalorder %s12, 1
      %p43 = por %p41, %p42
      %p44 = scmp.ne.s32.totalorder %s36, %s39
      %p45 = scmp.eq.s32.totalorder %s12, 0
      %p46 = por %p44, %p45
      %p47 = scmp.ne.s32.totalorder %s36, %s39
      %p48 = scmp.eq.s32.totalorder %s17, 1
      %p49 = por %p47, %p48
      %p50 = scmp.ne.s32.totalorder %s39, %s40
      %p51 = scmp.eq.s32.totalorder %s17, 0
      %p52 = por %p50, %p51
      %p53 = scmp.ne.s32.totalorder %s39, %s40
      %p54 = scmp.eq.s32.totalorder %s18, 1
      %p55 = por %p53, %p54
      %p57 = scmp.ne.s32.totalorder %s40, %s56
      %p58 = scmp.eq.s32.totalorder %s18, 0
      %p59 = por %p57, %p58
      %s61 = sadd.s32 %s60, 1
      %p64 = scmp.eq.s32.totalorder %s12, 1
      %p65 = scmp.ne.s32.totalorder %s60, %s62
      %p66 = scmp.eq.s32.totalorder %s12, 0
      %p67 = por %p65, %p66
      %p68 = scmp.ne.s32.totalorder %s60, %s62
      %p69 = scmp.eq.s32.totalorder %s17, 1
      %p70 = por %p68, %p69
      %p71 = scmp.ne.s32.totalorder %s62, %s63
      %p72 = scmp.eq.s32.totalorder %s17, 0
      %p73 = por %p71, %p72
      %p74 = scmp.ne.s32.totalorder %s62, %s63
      %p75 = scmp.eq.s32.totalorder %s18, 1
      %p76 = por %p74, %p75
      %p78 = scmp.ne.s32.totalorder %s63, %s77
      %p79 = scmp.eq.s32.totalorder %s18, 0
      %p80 = por %p78, %p79
      %s82 = sadd.s32 %s81, 1
      %p85 = scmp.eq.s32.totalorder %s12, 1
      %p86 = scmp.ne.s32.totalorder %s81, %s83
      %p87 = scmp.eq.s32.totalorder %s12, 0
      %p88 = por %p86, %p87
      %p89 = scmp.ne.s32.totalorder %s81, %s83
      %p90 = scmp.eq.s32.totalorder %s17, 1
      %p91 = por %p89, %p90
      %p92 = scmp.ne.s32.totalorder %s83, %s84
      %p93 = scmp.eq.s32.totalorder %s17, 0
      %p94 = por %p92, %p93
      %p95 = scmp.ne.s32.totalorder %s83, %s84
      %p96 = scmp.eq.s32.totalorder %s18, 1
      %p97 = por %p95, %p96
      %p99 = scmp.ne.s32.totalorder %s84, %s98
      %p100 = scmp.eq.s32.totalorder %s18, 0
      %p101 = por %p99, %p100
      %s102 = ssub.s32 %s19, %s31
      %s103 = ssub.s32 %s20, %s27
      %s104 = sor.u32 %s102, %s103
      %p105 = scmp.eq.s32.totalorder %s104, 0
      %s107 = sadd.s32 %s106, 1
      %s108 = scalar_select %p105, %s106, %s107
      %p111 = pneg %p105
      %p112 = scmp.eq.s32.totalorder %s12, 1
      %p113 = por %p111, %p112
      %p114 = scmp.ne.s32.totalorder %s106, %s109
      %p115 = scmp.eq.s32.totalorder %s12, 0
      %p116 = por %p114, %p115
      %p117 = scmp.ne.s32.totalorder %s106, %s109
      %p118 = scmp.eq.s32.totalorder %s17, 1
      %p119 = por %p117, %p118
      %p120 = scmp.ne.s32.totalorder %s109, %s110
      %p121 = scmp.eq.s32.totalorder %s17, 0
      %p122 = por %p120, %p121
      %p123 = scmp.ne.s32.totalorder %s109, %s110
      %p124 = scmp.eq.s32.totalorder %s18, 1
      %p125 = por %p123, %p124
      %p127 = scmp.ne.s32.totalorder %s110, %s126
      %p128 = scmp.eq.s32.totalorder %s18, 0
      %p129 = por %p127, %p128
      %p130 = scmp.le.s32.totalorder 1, %s12
      %p131 = scmp.lt.s32.totalorder %s12, 3
      %p132 = pnand %p130, %p131
      %p133 = pneg %p132
      // Predicated region
      $region9: #{tpu_custom_call.1} parent=5 // pred_check
        _
      $region10: #{tpu_custom_call.1} parent=5 // pred_check_branch
        %135 = sbr.rel (%p132) target = $region12
      $region11: #{tpu_custom_call.1} parent=5 // pred_region
        %s136 = ssub.s32 %s12, 1
        // Predicated region
        $region13: #{tpu_custom_call.1} parent=11 // pred_check
          %p137 = pneg %p73
        $region14: #{tpu_custom_call.1} parent=11 // pred_check_branch
          %139 = sbr.rel (%p137) target = $region16
        $region15: #{tpu_custom_call.1} parent=11 // pred_region
          _
        $region16: #{tpu_custom_call.1} parent=11 // pred_fallthru
          _
        // Predicated region
        $region17: #{tpu_custom_call.1} parent=11 // pred_check
          %p140 = pneg %p94
        $region18: #{tpu_custom_call.1} parent=11 // pred_check_branch
          %142 = sbr.rel (%p140) target = $region20
        $region19: #{tpu_custom_call.1} parent=11 // pred_region
          _
        $region20: #{tpu_custom_call.1} parent=11 // pred_fallthru
          _
      $region12: #{tpu_custom_call.1} parent=5 // pred_fallthru
        _
      %p143 = scmp.lt.s32.totalorder %s12, 2
      // Predicated region
      $region21: #{tpu_custom_call.1} parent=5 // pred_check
        %p144 = pneg %p143
      $region22: #{tpu_custom_call.1} parent=5 // pred_check_branch
        %146 = sbr.rel (%p144) target = $region24
      $region23: #{tpu_custom_call.1} parent=5 // pred_region
        // Predicated region
        $region25: #{tpu_custom_call.1} parent=23 // pred_check
          %p147 = pneg %p46
        $region26: #{tpu_custom_call.1} parent=23 // pred_check_branch
          %149 = sbr.rel (%p147) target = $region28
        $region27: #{tpu_custom_call.1} parent=23 // pred_region
          %s150 = smul.u32 2, %s20
          %p151 = scmp.lt.s32.totalorder %s19, 1
          %s152 = scalar_select %p151, %s19, 1
          %p153 = scmp.lt.s32.totalorder %s150, 1
          %s154 = scalar_select %p153, %s150, 1
          %s155 = smul.addr %s152, 2
          %s156 = sadd.s32 %s154, %s155
          %s157 = smul.addr %s156, 4
          %s158 = scalar_lea.vmem %s0, %s157
          %s159 = smul.u32 2, %s20
        $region28: #{tpu_custom_call.1} parent=23 // pred_fallthru
          _
      $region24: #{tpu_custom_call.1} parent=5 // pred_fallthru
        _
      %p160 = scmp.le.s32.totalorder 1, %s12
      %p161 = scmp.lt.s32.totalorder %s12, 3
      %p162 = pnand %p160, %p161
      %p163 = pneg %p162
      // Predicated region
      $region29: #{tpu_custom_call.1} parent=5 // pred_check
        _
      $region30: #{tpu_custom_call.1} parent=5 // pred_check_branch
        %165 = sbr.rel (%p162) target = $region32
      $region31: #{tpu_custom_call.1} parent=5 // pred_region
        %s166 = ssub.s32 %s12, 1
        %s167 = smul.u32 2, %s22
        %p168 = scmp.lt.s32.totalorder %s21, 1
        %s169 = scalar_select %p168, %s21, 1
        %p170 = scmp.lt.s32.totalorder %s167, 1
        %s171 = scalar_select %p170, %s167, 1
        %s172 = smul.addr %s169, 2
        %s173 = sadd.s32 %s171, %s172
        %s174 = smul.addr %s173, 4
        %s175 = scalar_lea.vmem %s0, %s174
        %p176 = pneg %p52
        %p177 = pneg %p49
        %p178 = pneg %p73
        %p179 = pneg %p70
        %p180 = pneg %p94
        %p181 = pneg %p91
        %p182 = pneg %p122
        %p183 = pneg %p119
        %s184 = sand.u32 %s109, 1
        %s185 = scalar_lea.sflag [#allocation3], %s184
        %s186 = sand.u32 %s109, 1
        %s187 = smul.addr %s186, 64
        %s188 = scalar_lea.vmem [#allocation2], %s187
        %s189 = smul.u32 2, %s22
        %p190 = scmp.lt.s32.totalorder %s21, 1
        %s191 = scalar_select %p190, %s21, 1
        %p192 = scmp.lt.s32.totalorder %s189, 1
        %s193 = scalar_select %p192, %s189, 1
        %s194 = smul.addr %s191, 2
        %s195 = sadd.s32 %s193, %s194
        %s196 = smul.addr %s195, 4
        %s197 = scalar_lea.vmem %s0, %s196
        %s198 = smul.u32 2, %s22
        %s199 = smul.u32 2, %s22
        %v201 = vld [vmem:[%s197] sm:$0xff]
        %v203 = vcombine.high %v201, %v201
        %v205 = vpack.c.bf16 %v201, %v201
        %v206 = vpack.c.bf16 %v203, %v203
        %v207 = vld [vmem:[%s1] sm:$0xf]
        %v208 = vld [vmem:[%s1 + $0x4] sm:$0xf]
        %v209 = vld [vmem:[%s1 + $0x8] sm:$0xf]
        %v210 = vld [vmem:[%s1 + $0xc] sm:$0xf]
        %v211 = vld [vmem:[%s2] sm:$0xff]
        %v212 = vld [vmem:[%s2 + $0x8] sm:$0xff]
        %v213 = vld [vmem:[%s2 + $0x10] sm:$0xff]
        %v214 = vld [vmem:[%s2 + $0x18] sm:$0xff]
        %216 = vset.pattern.permute.xlu0 0
        %217 = vperm.xlu0 %216, %v211
        %v218 = vpop.permute.xlu0 %217
        %221 = vset.pattern.permute.xlu0 0
        %222 = vperm.xlu0 %221, %v212
        %v223 = vpop.permute.xlu0 %222
        %226 = vset.pattern.permute.xlu0 0
        %227 = vperm.xlu0 %226, %v213
        %v228 = vpop.permute.xlu0 %227
        %231 = vset.pattern.permute.xlu0 0
        %232 = vperm.xlu0 %231, %v214
        %v233 = vpop.permute.xlu0 %232
        %v239 = vunpack.c.l.b16 %v207
        %v240 = vunpack.c.l.b16 %v208
        %v241 = vunpack.c.l.b16 %v209
        %v242 = vunpack.c.l.b16 %v210
        %v243 = vpack.c.b16 %v240, %v239
        %v244 = vpack.c.b16 %v242, %v241
        %vm245 = vcmask 31744
        %v247 = vsel %vm245, %v243, 0
        %v250 = vsel %vm245, %v244, 0
        %vm252 = vcmask 1041408
        %v254 = vsel %vm252, %v205, 0
        %v257 = vsel %vm252, %v206, 0
        %259 = vmatprep.subr.bf16.mxu0 %v257
        %260 = vmatpush1.bf16.msra.mxu0 %v254
        %261 = vmatprep.subr.bf16.mxu0 0
        %262 = vmatpush1.bf16.msra.mxu0 0
        %263 = vmatprep.subr.bf16.mxu0 0
        %264 = vmatpush1.bf16.msra.mxu0 0
        %265 = vmatprep.subr.bf16.mxu0 0
        %266 = vmatpush1.bf16.msra.mxu0 0
        %267 = vmatprep.subr.bf16.mxu0 0
        %268 = vmatpush1.bf16.msra.mxu0 0
        %269 = vmatprep.subr.bf16.mxu0 0
        %270 = vmatpush1.bf16.msra.mxu0 0
        %271 = vmatprep.subr.bf16.mxu0 0
        %272 = vmatpush1.bf16.msra.mxu0 0
        %273 = vmatprep.subr.bf16.mxu0 0
        %274 = vmatpush1.bf16.msra.mxu0 0
        %275 = vmatprep.subr.bf16.mxu0 0
        %276 = vmatpush1.bf16.msra.mxu0 0
        %277 = vmatprep.subr.bf16.mxu0 0
        %278 = vmatpush1.bf16.msra.mxu0 0
        %279 = vmatprep.subr.bf16.mxu0 0
        %280 = vmatpush1.bf16.msra.mxu0 0
        %281 = vmatprep.subr.bf16.mxu0 0
        %282 = vmatpush1.bf16.msra.mxu0 0
        %283 = vmatprep.subr.bf16.mxu0 0
        %284 = vmatpush1.bf16.msra.mxu0 0
        %285 = vmatprep.subr.bf16.mxu0 0
        %286 = vmatpush1.bf16.msra.mxu0 0
        %287 = vmatprep.subr.bf16.mxu0 0
        %288 = vmatpush1.bf16.msra.mxu0 0
        %289 = vmatprep.subr.bf16.mxu0 0
        %290 = vmatpush1.bf16.msra.mxu0 0
        %291 = vmatprep.mubr.bf16.mxu0 0
        %292 = vmatmul.mubr.bf16.gmra.mrb[0].mxu0 %v247
        %v293 = vpop.f32.mrb[0].mxu0
        %v294 = vadd.f32 %v218, %v293
        %v295 = vpop.f32.mrb[0].mxu0
        %v296 = vadd.f32 %v218, %v295
        %v297 = vpop.f32.mrb[0].mxu0
        %v298 = vadd.f32 %v223, %v297
        %v299 = vpop.f32.mrb[0].mxu0
        %v300 = vadd.f32 %v223, %v299
        %301 = vmatprep.mubr.bf16.mxu0 0
        %302 = vmatmul.mubr.bf16.gmra.mrb[0].mxu0 %v250
        %v303 = vpop.f32.mrb[0].mxu0
        %v304 = vadd.f32 %v228, %v303
        %v305 = vpop.f32.mrb[0].mxu0
        %v306 = vadd.f32 %v228, %v305
        %v307 = vpop.f32.mrb[0].mxu0
        %v308 = vadd.f32 %v233, %v307
        %v309 = vpop.f32.mrb[0].mxu0
        %v310 = vadd.f32 %v233, %v309
        %311 = vdwg.mxu0
        %312 = vst [vmem:[%s188] sm:$0xff] %v294
        %313 = vst [vmem:[%s188 + $0x8] sm:$0xff] %v296
        %314 = vst [vmem:[%s188 + $0x10] sm:$0xff] %v298
        %315 = vst [vmem:[%s188 + $0x18] sm:$0xff] %v300
        %316 = vst [vmem:[%s188 + $0x20] sm:$0xff] %v304
        %317 = vst [vmem:[%s188 + $0x28] sm:$0xff] %v306
        %318 = vst [vmem:[%s188 + $0x30] sm:$0xff] %v308
        %319 = vst [vmem:[%s188 + $0x38] sm:$0xff] %v310
        %s320 = sand.u32 %s109, 1
        %s321 = scalar_lea.sflag [#allocation3], %s320
        %s322 = sand.u32 %s109, 1
        %s323 = smul.addr %s322, 64
        %s324 = scalar_lea.vmem [#allocation2], %s323
        // Predicated region
        $region33: #{tpu_custom_call.1} parent=31 // pred_check
          %p325 = pneg %p119
        $region34: #{tpu_custom_call.1} parent=31 // pred_check_branch
          %327 = sbr.rel (%p325) target = $region36
        $region35: #{tpu_custom_call.1} parent=31 // pred_region
          %s328 = smul.u32 2, %s22
          %s330 = ssub.s32 1024, 1024
          %331 = vsyncadd %s321, %s330
          %s332 = smul.addr %s21, 8
          %s333 = sadd.s32 %s328, %s332
          %s334 = smul.addr %s333, 128
          %s335 = scalar_lea.hbm %s3, %s334
          %s336 = sshll.u32 %s324, 4
          %s337 = int_to_ptr.vmem [resolvable:$true] %s336
          %342 = dma.vmem_to_hbm [thread:$0]  %s337, 1024, %s335, %s321, 256, 256, 16
        $region36: #{tpu_custom_call.1} parent=31 // pred_fallthru
          _
      $region32: #{tpu_custom_call.1} parent=5 // pred_fallthru
        _
      %p343 = scmp.le.s32.totalorder 2, %s12
      // Predicated region
      $region37: #{tpu_custom_call.1} parent=5 // pred_check
        %p344 = pneg %p343
      $region38: #{tpu_custom_call.1} parent=5 // pred_check_branch
        %346 = sbr.rel (%p344) target = $region40
      $region39: #{tpu_custom_call.1} parent=5 // pred_region
        %s347 = ssub.s32 %s12, 2
        // Predicated region
        $region41: #{tpu_custom_call.1} parent=39 // pred_check
          %p348 = pneg %p125
        $region42: #{tpu_custom_call.1} parent=39 // pred_check_branch
          %350 = sbr.rel (%p348) target = $region44
        $region43: #{tpu_custom_call.1} parent=39 // pred_region
          %s351 = sand.u32 %s110, 1
          %s352 = scalar_lea.sflag [#allocation3], %s351
          %s353 = sand.u32 %s110, 1
          %s354 = smul.addr %s353, 64
          %s355 = scalar_lea.vmem [#allocation2], %s354
          %356 = dma.done %s352, 1024
        $region44: #{tpu_custom_call.1} parent=39 // pred_fallthru
          _
      $region40: #{tpu_custom_call.1} parent=5 // pred_fallthru
        _
    $region6: #{tpu_custom_call.1} parent=1 // loop_footer
      %s16 = sadd.s32 1, %s12
    $region7: #{tpu_custom_call.1} parent=1 // loop_footer_branch
      %11 = sbr.rel target = $region3
    $region8: #{tpu_custom_call.1} parent=1 // loop_exit
      _
    %357 = vsyncpa [#allocation3], 1
    %s358 = scalar_lea.sflag [#allocation3], 1
    %359 = vsyncpa %s358, 1

</llo_original>
